<compile_context>
chip_gen: v6e
topology: v6e:2x2x1
jax: 0.10.0
libtpu: 0.0.40
codegen_flags: <defaults>
</compile_context>

<pallas_src>
import functools
import math

import numpy as np
import jax
import jax.numpy as jnp
from jax.experimental import pallas as pl
from jax.experimental.pallas import tpu as pltpu


# ----------------------------------------------------------------------------
# Mel bounds (host side, mirrors LearnOVSTFT2MELChannel.__init__, mel_scale='htk')
# ----------------------------------------------------------------------------
def _hz_to_mel(freq):
    return 2595.0 * math.log10(1.0 + freq / 700.0)


def _mel_to_hz(mels):
    return 700.0 * (10.0 ** (mels / 2595.0) - 1.0)


def compute_bounds(nfreq, nfilters, sample_rate):
    all_freqs = np.linspace(0.0, sample_rate // 2, nfreq)
    m_min = _hz_to_mel(0.0)
    m_max = _hz_to_mel(sample_rate / 2.0)
    m_pts = np.linspace(m_min, m_max, nfilters + 2)
    f_pts = _mel_to_hz(m_pts)
    bounds = [0]
    for i in range(1, len(f_pts) - 1):
        bounds.append(int(np.argmax(all_freqs > f_pts[i])))
    bounds.append(nfreq)
    return bounds


# ----------------------------------------------------------------------------
# Deterministic parameter init (shapes follow the PyTorch module's __init__),
# plus the fused/relaid weight matrices consumed by the kernels.
# ----------------------------------------------------------------------------
def init_params(key, bounds, nfilters, n_channels, dense_w, dense_w2, nfreq):
    C = n_channels
    ce = (C + 1) // 2            # number of 0::2 channels; module requires C + ce == C + 1
    ccat = C + ce
    D, D2 = dense_w, dense_w2

    w1_list, w2_list, b2_list = [], [], []
    # forward: one block-sparse weight  [Ccat*nfreq, nfilters*D]
    w_fwd = np.zeros((ccat * nfreq, nfilters * D), np.float32)
    # inverse: one block-sparse weight  [nfilters*D, D2*nfreq]  (+ fused bias)
    w_inv = np.zeros((nfilters * D, D2 * nfreq), np.float32)
    b_inv = np.zeros((1, D2 * nfreq), np.float32)

    for f in range(nfilters):
        lo, hi = bounds[f], bounds[f + 2]
        wf = hi - lo
        kf = jax.random.fold_in(key, f)
        k1, k2, k3 = jax.random.split(kf, 3)
        # trans1[f]: Linear(in=ccat*wf, out=D, bias=False)  -> weight [D, ccat*wf]
        w1 = np.asarray(jax.random.normal(k1, (D, ccat * wf), jnp.float32)) * 0.05
        # trans2[f]: Conv1d(D, wf*D2, 1)                    -> weight [wf*D2, D], bias [wf*D2]
        w2 = np.asarray(jax.random.normal(k2, (wf * D2, D), jnp.float32)) * 0.05
        b2 = np.asarray(jax.random.normal(k3, (wf * D2,), jnp.float32)) * 0.05
        w1_list.append(jnp.asarray(w1))
        w2_list.append(jnp.asarray(w2))
        b2_list.append(jnp.asarray(b2))

        # ---- forward relayout: rows c*nfreq + freq, cols f*D + d ----
        w1r = w1.reshape(D, ccat, wf)
        for c in range(ccat):
            w_fwd[c * nfreq + lo:c * nfreq + hi, f * D:(f + 1) * D] = w1r[:, c, :].T

        # ---- inverse relayout: rows f*D + d, cols d2*nfreq + freq (scatter-add baked in) ----
        w2r = w2.reshape(D2, wf, D)          # conv out-channel o = d2*wf + k
        b2r = b2.reshape(D2, wf)
        for d2 in range(D2):
            w_inv[f * D:(f + 1) * D, d2 * nfreq + lo:d2 * nfreq + hi] += w2r[d2].T
            b_inv[0, d2 * nfreq + lo:d2 * nfreq + hi] += b2r[d2]

    # fold the overlap-region /2 (applied after all adds, incl. biases) into weights + bias
    scale = np.ones((nfreq,), np.float32)
    scale[bounds[1]:bounds[-2]] = 0.5
    scale_full = np.tile(scale, D2)
    w_inv *= scale_full[None, :]
    b_inv *= scale_full[None, :]

    params = dict(
        w_fwd=jnp.asarray(w_fwd, jnp.bfloat16),   # bf16 MXU operands, f32 accumulate
        w_inv=jnp.asarray(w_inv, jnp.bfloat16),
        b_inv=jnp.asarray(b_inv, jnp.float32),
    )
    ref = dict(w1=w1_list, w2=w2_list, b2=b2_list)
    return params, ref, ccat


# ----------------------------------------------------------------------------
# Pallas kernels
# ----------------------------------------------------------------------------
def _fwd_kernel(floor_ref, x_ref, w_ref, o_ref, *, n_channels, nfreq):
    """power_to_db -> partial MXU dots per channel block (dB channels + log-power channels).

    x_ref : [C, bt, nfreq] f32 tile (module input layout, no wrapper transpose)
    w_ref : [Ccat*nfreq, nfilters*D] bf16 fused weight (whole array, VMEM-resident)
    o_ref : [bt, nfilters*D] bf16 (f32 accumulation, cast on final store)
    """
    floor = floor_ref[0]
    c10 = 10.0 / math.log(10.0)
    F = nfreq

    pdbs = []
    acc = None
    # dB channels: rows c*nfreq .. (c+1)*nfreq of the fused weight
    for c in range(n_channels):
        pdb = jnp.maximum(c10 * jnp.log(jnp.maximum(x_ref[c], 1e-10)), floor)
        pdbs.append(pdb)
        part = jnp.dot(pdb.astype(jnp.bfloat16), w_ref[c * F:(c + 1) * F, :],
                       preferred_element_type=jnp.float32)
        acc = part if acc is None else acc + part
    # log-power channels (even dB channels): rows (C+idx)*nfreq ..
    for idx, c in enumerate(range(0, n_channels, 2)):
        lp = jnp.log(pdbs[c] * pdbs[c] + 1e-8)
        r0 = (n_channels + idx) * F
        acc = acc + jnp.dot(lp.astype(jnp.bfloat16), w_ref[r0:r0 + F, :],
                            preferred_element_type=jnp.float32)
    o_ref[...] = acc.astype(o_ref.dtype)


def _inv_kernel(y_ref, w_ref, b_ref, o_ref):
    """Fused per-filter 1x1 Conv1d + overlap scatter-add + /2: one matmul + bias."""
    lhs = y_ref[...].astype(jnp.bfloat16)
    o_ref[...] = (jnp.dot(lhs, w_ref[...], preferred_element_type=jnp.float32)
                  + b_ref[...]).astype(o_ref.dtype)


def _pick_t_tile(T):
    """Time-tile: largest divisor of T <= 512 (v7x VMEM headroom), multiple of 8.

    The batch grid axis already provides >= 2 blocks, so both v7x TensorCores are used
    even when T fits in a single tile.
    """
    for t in (512, 256, 128, 64, 32, 16, 8):
        if T % t == 0:
            return t
    return T   # tiny / indivisible T: single full-T block (== full dim, layout-legal)


# ----------------------------------------------------------------------------
# Wrappers. Forward emits the "natural" [B, T, nfilters*D] activation layout (bf16);
# the inverse consumes it directly -> no activation-layout round trips through HBM.
# ----------------------------------------------------------------------------
def forward_pallas(x, params, nfilters, dense_w, out_dtype=jnp.bfloat16):
    """x: [B, C, T, nfreq] power spectrogram -> [B, T, nfilters*dense_w] (natural layout)."""
    B, C, T, F = x.shape
    N = nfilters * dense_w
    bt = _pick_t_tile(T)

    # power_to_db clamp floor = global max of log_spec - top_db (scalar, SMEM).
    # One reduction pass over x; the kernel reads x directly in its original layout.
    floor = 10.0 * jnp.log10(jnp.maximum(jnp.max(x), 1e-10)) - 80.0
    floor = jnp.reshape(floor, (1,)).astype(jnp.float32)

    return pl.pallas_call(
        functools.partial(_fwd_kernel, n_channels=C, nfreq=F),
        out_shape=jax.ShapeDtypeStruct((B, T, N), out_dtype),
        grid=(B, T // bt),
        in_specs=[
            pl.BlockSpec(memory_space=pltpu.MemorySpace.SMEM),              # floor scalar
            pl.BlockSpec((None, C, bt, F), lambda b, t: (b, 0, t, 0)),      # x tile, no transpose
            pl.BlockSpec(memory_space=pltpu.MemorySpace.VMEM),              # fused weight, copied once
        ],
        out_specs=pl.BlockSpec((None, bt, N), lambda b, t: (b, t, 0)),      # lane-dense output
        compiler_params=pltpu.CompilerParams(
            dimension_semantics=("parallel", "parallel")),
    )(floor, x.astype(jnp.float32), params["w_fwd"])


def fwd_natural_to_module(y_nat, nfilters, dense_w):
    """[B, T, nfilters*D] -> module layout [B, D, T, nfilters] (only needed at the boundary)."""
    B, T, _ = y_nat.shape
    return jnp.transpose(y_nat.reshape(B, T, nfilters, dense_w), (0, 3, 1, 2))


def fwd_module_to_natural(y_mod):
    """Module layout [B, D, T, nfilters] -> natural [B, T, nfilters*D]."""
    B, D, T, F = y_mod.shape
    return jnp.transpose(y_mod, (0, 2, 3, 1)).reshape(B, T, F * D)


def inverse_pallas(y_nat, params, nfreq, dense_w2, module_layout=True):
    """y_nat: [B, T, nfilters*dense_w] (natural layout from forward_pallas, bf16 or f32)."""
    B, T, K = y_nat.shape
    N = dense_w2 * nfreq
    bt = _pick_t_tile(T)

    out = pl.pallas_call(
        _inv_kernel,
        out_shape=jax.ShapeDtypeStruct((B, T, N), jnp.float32),
        grid=(B, T // bt),
        in_specs=[
            pl.BlockSpec((None, bt, K), lambda b, t: (b, t, 0)),            # activation tile
            pl.BlockSpec(memory_space=pltpu.MemorySpace.VMEM),              # fused conv+scatter+/2 weight
            pl.BlockSpec(memory_space=pltpu.MemorySpace.VMEM),              # fused bias
        ],
        out_specs=pl.BlockSpec((None, bt, N), lambda b, t: (b, t, 0)),      # lane-dense output
        compiler_params=pltpu.CompilerParams(
            dimension_semantics=("parallel", "parallel")),
    )(y_nat, params["w_inv"], params["b_inv"])

    if module_layout:
        # [B, T, D2*nfreq] -> [B, D2, T, nfreq] (module output layout; boundary-only transpose)
        return jnp.transpose(out.reshape(B, T, dense_w2, nfreq), (0, 2, 1, 3))
    return out


# ----------------------------------------------------------------------------
# Pure-JAX references (mirror the PyTorch forward exactly, f32 HIGHEST precision)
# ----------------------------------------------------------------------------
def ref_forward(x, w1_list, bounds, nfilters):
    B, C, T, F = x.shape
    ls = 10.0 * jnp.log10(jnp.maximum(x, 1e-10))
    ls = jnp.maximum(ls, jnp.max(ls) - 80.0)           # power_to_db
    xp = jnp.transpose(ls, (0, 2, 1, 3))               # [B, T, C, F]
    xcat = jnp.concatenate([xp, jnp.log(xp[:, :, 0::2, :] ** 2 + 1e-8)], axis=2)
    outs = []
    for f in range(nfilters):
        band = xcat[:, :, :, bounds[f]:bounds[f + 2]]
        flat = band.reshape(B, T, -1)
        outs.append(jnp.einsum("btk,dk->btd", flat, w1_list[f],
                               precision=jax.lax.Precision.HIGHEST))
    y = jnp.stack(outs, axis=-1)                       # [B, T, D, nfilters]
    return jnp.transpose(y, (0, 2, 1, 3))              # [B, D, T, nfilters]


def ref_inverse(y, w2_list, b2_list, bounds, nfilters, nfreq, D2):
    B, D, T, F = y.shape
    out = jnp.zeros((B, D2, nfreq, T), jnp.float32)
    for f in range(nfilters):
        lo, hi = bounds[f], bounds[f + 2]
        wf = hi - lo
        yf = jnp.einsum("od,bdt->bot", w2_list[f], y[:, :, :, f],
                        precision=jax.lax.Precision.HIGHEST) + b2_list[f][None, :, None]
        yf = yf.reshape(B, D2, wf, T)
        out = out.at[:, :, lo:hi, :].add(yf)
    out = out.at[:, :, bounds[1]:bounds[-2], :].divide(2.0)
    return jnp.transpose(out, (0, 1, 3, 2))            # [B, D2, T, nfreq]


# ----------------------------------------------------------------------------
if __name__ == "__main__":
    nfreq, nfilters = 64, 8
    n_channels = 2                 # module requires C + ceil(C/2) == C + 1  =>  C in {1, 2}
    dense_w, dense_w2 = 32, 4
    B, T = 2, 8
    sample_rate = 16000

    bounds = compute_bounds(nfreq, nfilters, sample_rate)
    key = jax.random.PRNGKey(0)
    kp, kx = jax.random.split(key)
    params, ref_p, ccat = init_params(kp, bounds, nfilters, n_channels,
                                      dense_w, dense_w2, nfreq)

    # input power spectrogram, non-negative: [B, n_channels, T, nfreq]
    x = jax.random.uniform(kx, (B, n_channels, T, nfreq), jnp.float32) * 2.0

    # ---- forward (inverse=False): natural [B, T, nfilters*D] bf16 activation ----
    y_nat = forward_pallas(x, params, nfilters, dense_w)
    y_nat = jax.block_until_ready(y_nat)
    y_mod = fwd_natural_to_module(y_nat.astype(jnp.float32), nfilters, dense_w)
    y_ref = ref_forward(x, ref_p["w1"], bounds, nfilters)
    # kernel uses bf16 MXU operands + bf16 output with f32 accumulation -> bf16-sized tolerance
    np.testing.assert_allclose(np.asarray(y_mod), np.asarray(y_ref), rtol=5e-2, atol=5e-1)

    # ---- inverse (inverse=True), chained directly on the natural-layout bf16 activation ----
    z = inverse_pallas(y_nat, params, nfreq, dense_w2)
    z = jax.block_until_ready(z)
    z_ref = ref_inverse(y_ref, ref_p["w2"], ref_p["b2"], bounds, nfilters, nfreq, dense_w2)
    np.testing.assert_allclose(np.asarray(z), np.asarray(z_ref), rtol=5e-2, atol=5e-1)

    print("KERNEL_OK")
</pallas_src>

<mosaic_0001>
module attributes {stable_mosaic.version = 11 : i64} {
  func.func @_fwd_kernel(%arg0: i32, %arg1: i32, %arg2: memref<1xf32, #tpu.memory_space<smem>>, %arg3: memref<1x2x8x64xf32, #tpu.memory_space<vmem>>, %arg4: memref<192x256xbf16, #tpu.memory_space<vmem>>, %arg5: memref<1x8x256xbf16, #tpu.memory_space<vmem>>) attributes {dimension_semantics = [#tpu.dimension_semantics<parallel>, #tpu.dimension_semantics<parallel>], iteration_bounds = array<i64: 2, 1>, scalar_prefetch = 0 : i64, scratch_operands = 0 : i64, tpu.core_type = #tpu.core_type<tc>, window_params = [{transform_indices = @transform_0, window_bounds = array<i64: 1>}, {transform_indices = @transform_1, window_bounds = array<i64: 1, 2, 8, 64>}, {pipeline_mode = #tpu.pipeline_mode<synchronous>, transform_indices = @transform_2, window_bounds = array<i64: 192, 256>}, {transform_indices = @transform_3, window_bounds = array<i64: 1, 8, 256>}]} {
    %c0 = arith.constant 0 : index
    %0 = memref.load %arg2[%c0] : memref<1xf32, #tpu.memory_space<smem>>
    %c0_0 = arith.constant 0 : index
    %c0_1 = arith.constant 0 : index
    %c0_2 = arith.constant 0 : index
    %c0_3 = arith.constant 0 : index
    %1 = vector.load %arg3[%c0_0, %c0_1, %c0_2, %c0_3] : memref<1x2x8x64xf32, #tpu.memory_space<vmem>>, vector<1x1x8x64xf32>
    %2 = vector.shape_cast %1 : vector<1x1x8x64xf32> to vector<8x64xf32>
    %cst = arith.constant 1.000000e-10 : f32
    %3 = vector.broadcast %cst : f32 to vector<8x64xf32>
    %4 = arith.maximumf %2, %3 : vector<8x64xf32>
    %5 = math.log %4 : vector<8x64xf32>
    %cst_4 = arith.constant 4.34294462 : f32
    %6 = vector.broadcast %cst_4 : f32 to vector<8x64xf32>
    %7 = arith.mulf %6, %5 : vector<8x64xf32>
    %8 = vector.broadcast %0 : f32 to vector<8x64xf32>
    %9 = arith.maximumf %7, %8 : vector<8x64xf32>
    %10 = arith.truncf %9 : vector<8x64xf32> to vector<8x64xbf16>
    %c0_5 = arith.constant 0 : index
    %c0_6 = arith.constant 0 : index
    %11 = vector.load %arg4[%c0_5, %c0_6] : memref<192x256xbf16, #tpu.memory_space<vmem>>, vector<64x256xbf16>
    %cst_7 = arith.constant dense<0.000000e+00> : vector<8x256xf32>
    %12 = tpu.matmul %10, %11, %cst_7 {dimension_numbers = #tpu.dot_dimension_numbers<[1], [0], [0], [1], [0, 0, 1, 1], [], []>} : vector<8x64xbf16>, vector<64x256xbf16>, vector<8x256xf32> -> vector<8x256xf32>
    %c0_8 = arith.constant 0 : index
    %c1 = arith.constant 1 : index
    %c0_9 = arith.constant 0 : index
    %c0_10 = arith.constant 0 : index
    %13 = vector.load %arg3[%c0_8, %c1, %c0_9, %c0_10] : memref<1x2x8x64xf32, #tpu.memory_space<vmem>>, vector<1x1x8x64xf32>
    %14 = vector.shape_cast %13 : vector<1x1x8x64xf32> to vector<8x64xf32>
    %cst_11 = arith.constant 1.000000e-10 : f32
    %15 = vector.broadcast %cst_11 : f32 to vector<8x64xf32>
    %16 = arith.maximumf %14, %15 : vector<8x64xf32>
    %17 = math.log %16 : vector<8x64xf32>
    %cst_12 = arith.constant 4.34294462 : f32
    %18 = vector.broadcast %cst_12 : f32 to vector<8x64xf32>
    %19 = arith.mulf %18, %17 : vector<8x64xf32>
    %20 = vector.broadcast %0 : f32 to vector<8x64xf32>
    %21 = arith.maximumf %19, %20 : vector<8x64xf32>
    %22 = arith.truncf %21 : vector<8x64xf32> to vector<8x64xbf16>
    %c64 = arith.constant 64 : index
    %c0_13 = arith.constant 0 : index
    %23 = vector.load %arg4[%c64, %c0_13] : memref<192x256xbf16, #tpu.memory_space<vmem>>, vector<64x256xbf16>
    %cst_14 = arith.constant dense<0.000000e+00> : vector<8x256xf32>
    %24 = tpu.matmul %22, %23, %cst_14 {dimension_numbers = #tpu.dot_dimension_numbers<[1], [0], [0], [1], [0, 0, 1, 1], [], []>} : vector<8x64xbf16>, vector<64x256xbf16>, vector<8x256xf32> -> vector<8x256xf32>
    %25 = arith.addf %12, %24 : vector<8x256xf32>
    %26 = arith.mulf %9, %9 : vector<8x64xf32>
    %cst_15 = arith.constant 9.99999993E-9 : f32
    %27 = vector.broadcast %cst_15 : f32 to vector<8x64xf32>
    %28 = arith.addf %26, %27 : vector<8x64xf32>
    %29 = math.log %28 : vector<8x64xf32>
    %30 = arith.truncf %29 : vector<8x64xf32> to vector<8x64xbf16>
    %c128 = arith.constant 128 : index
    %c0_16 = arith.constant 0 : index
    %31 = vector.load %arg4[%c128, %c0_16] : memref<192x256xbf16, #tpu.memory_space<vmem>>, vector<64x256xbf16>
    %cst_17 = arith.constant dense<0.000000e+00> : vector<8x256xf32>
    %32 = tpu.matmul %30, %31, %cst_17 {dimension_numbers = #tpu.dot_dimension_numbers<[1], [0], [0], [1], [0, 0, 1, 1], [], []>} : vector<8x64xbf16>, vector<64x256xbf16>, vector<8x256xf32> -> vector<8x256xf32>
    %33 = arith.addf %25, %32 : vector<8x256xf32>
    %34 = arith.truncf %33 : vector<8x256xf32> to vector<8x256xbf16>
    %c0_18 = arith.constant 0 : index
    %c0_19 = arith.constant 0 : index
    %c0_20 = arith.constant 0 : index
    %35 = vector.load %arg5[%c0_18, %c0_19, %c0_20] : memref<1x8x256xbf16, #tpu.memory_space<vmem>>, vector<1x8x256xbf16>
    %36 = vector.shape_cast %35 : vector<1x8x256xbf16> to vector<8x256xbf16>
    %37 = vector.shape_cast %34 : vector<8x256xbf16> to vector<1x8x256xbf16>
    tpu.vector_store %arg5[%c0_18, %c0_19, %c0_20], %37 {strides = array<i32>} : memref<1x8x256xbf16, #tpu.memory_space<vmem>>, vector<1x8x256xbf16>,
    return
  }
  func.func @transform_0(%arg0: i32, %arg1: i32) -> i32 {
    %c0_i32 = arith.constant 0 : i32
    %c0_i32_0 = arith.constant 0 : i32
    return %c0_i32 : i32
  }
  func.func @transform_1(%arg0: i32, %arg1: i32) -> (i32, i32, i32, i32) {
    %c0_i32 = arith.constant 0 : i32
    %c0_i32_0 = arith.constant 0 : i32
    %c0_i32_1 = arith.constant 0 : i32
    return %arg0, %c0_i32, %arg1, %c0_i32_0 : i32, i32, i32, i32
  }
  func.func @transform_2(%arg0: i32, %arg1: i32) -> (i32, i32) {
    %c0_i32 = arith.constant 0 : i32
    %c0_i32_0 = arith.constant 0 : i32
    %c0_i32_1 = arith.constant 0 : i32
    return %c0_i32, %c0_i32_0 : i32, i32
  }
  func.func @transform_3(%arg0: i32, %arg1: i32) -> (i32, i32, i32) {
    %c0_i32 = arith.constant 0 : i32
    %c0_i32_0 = arith.constant 0 : i32
    return %arg0, %arg1, %c0_i32 : i32, i32, i32
  }
}

</mosaic_0001>

<llo_original>
// kernel: tpu_custom_call.1
$region0: #{tpu_custom_call.1}
  #allocation0 [shape = 'u32[]', space=smem, size = 0x4, offset = 0x4, fixed_abs, tag = 'smem constant byte address 0x4 - core index']
  #allocation1 [shape = 'u32[144,128]{1,0:T(1,128)}', space=vmem, size = 0x12000, scoped, tag = 'internal scratch']
  #allocation2 [shape = 'f32[1]{0:T(128)S(6)}', space=smem, size = 0x200, scoped, tag = 'scoped memory for tpu_custom_call.1']
  %s0 = inlined_call_operand.<no memory space> [shape: f32[1], index: 0, kind: input, shape index: {}]
  %s1 = inlined_call_operand.hbm [shape: f32[2,2,8,64], index: 1, kind: input, shape index: {}]
  %s2 = inlined_call_operand.hbm [shape: bf16[192,256], index: 2, kind: input, shape index: {}]
  %s3 = inlined_call_operand.hbm [shape: bf16[2,8,256], index: 3, kind: output, shape index: {}]
  %s4 = sld [smem:[#allocation0]]
  $region53: #{tpu_custom_call.1} parent=0
    _
  %s6 = ssub.s32 1, %s4
  %s7 = scalar_select 0, %s6, %s4
  %8 = sst [smem:[#allocation2]] %s0
  $region1: #{tpu_custom_call.1} parent=0
    #allocation3 [shape = 'u8[16384]{0}', space=vmem, size = 0x4000, scoped, tag = 'input window, operand 1']
    #allocation4 [shape = 's32[2]{0}', space=sflag, size = 0x8, scoped, tag = 'scoped memory for tpu_custom_call.1']
    #allocation5 [shape = 's32[2]{0}', space=sflag, size = 0x8, scoped, tag = 'scoped memory for tpu_custom_call.1']
    #allocation6 [shape = 'u8[98304]{0}', space=vmem, size = 0x18000, scoped, tag = 'input window, operand 2, single buffered']
    #allocation7 [shape = 's32[1]{0}', space=sflag, size = 0x4, scoped, tag = 'scoped memory for tpu_custom_call.1']
    #allocation8 [shape = 'u8[8192]{0}', space=vmem, size = 0x2000, scoped, tag = 'output window, operand 0']
    %9 = vsyncpa [#allocation4], 0
    %s10 = scalar_lea.sflag [#allocation4], 1
    %11 = vsyncpa %s10, 0
    %12 = vsyncpa [#allocation7], 0
    %13 = vsyncpa [#allocation5], 0
    %s14 = scalar_lea.sflag [#allocation5], 1
    %15 = vsyncpa %s14, 0
    loop: start=0, step=1, limit=4
    $region2: #{tpu_custom_call.1} parent=1 // loop_pre_header
      _
    $region3: #{tpu_custom_call.1} parent=1 // loop_header
      %s17 = sphi 0, %s21
      %p18 = scmp.ge.s32.totalorder %s17, 4
      %s24 = sphi 0, %s36
      %s25 = sphi 0, %s32
      %s26 = sphi 0, %s24
      %s27 = sphi 0, %s25
      %s28 = sphi 0, %s26
      %s29 = sphi 0, %s27
      %s37 = sphi 0, %s37
      %s39 = sphi 0, %s37
      %s40 = sphi 0, %s39
      %s54 = sphi 0, %s40
      %s62 = sphi 0, %s64
      %s65 = sphi 0, %s62
      %s66 = sphi 0, %s65
      %s82 = sphi 0, %s66
      %s86 = sphi 0, %s86
      %s88 = sphi 0, %s86
      %s89 = sphi 0, %s88
      %s103 = sphi 0, %s89
      %s111 = sphi 0, %s113
      %s114 = sphi 0, %s111
      %s115 = sphi 0, %s114
      %s131 = sphi 0, %s115
    $region4: #{tpu_custom_call.1} parent=1 // loop_header_branch
      %20 = sbr.rel (%p18) target = $region8
    $region5: #{tpu_custom_call.1} parent=1 // loop_body
      %s22 = ssub.s32 %s17, 1
      %s23 = ssub.s32 %s17, 2
      %s30 = sadd.s32 1, %s25
      %p31 = scmp.ge.s32.totalorder %s30, 1
      %s32 = scalar_select %p31, 0, %s30
      %s33 = sadd.s32 1, %s24
      %s34 = scalar_select %p31, %s33, %s24
      %p35 = scmp.ge.s32.totalorder %s34, 2
      %s36 = scalar_select %p35, 0, %s34
      %s38 = sadd.s32 %s37, 1
      %p41 = scmp.eq.s32.totalorder %s17, 1
      %p42 = scmp.ne.s32.totalorder %s37, %s39
      %p43 = scmp.eq.s32.totalorder %s17, 0
      %p44 = por %p42, %p43
      %p45 = scmp.ne.s32.totalorder %s37, %s39
      %p46 = scmp.eq.s32.totalorder %s22, 1
      %p47 = por %p45, %p46
      %p48 = scmp.ne.s32.totalorder %s39, %s40
      %p49 = scmp.eq.s32.totalorder %s22, 0
      %p50 = por %p48, %p49
      %p51 = scmp.ne.s32.totalorder %s39, %s40
      %p52 = scmp.eq.s32.totalorder %s23, 1
      %p53 = por %p51, %p52
      %p55 = scmp.ne.s32.totalorder %s40, %s54
      %p56 = scmp.eq.s32.totalorder %s23, 0
      %p57 = por %p55, %p56
      %s58 = ssub.s32 %s24, %s36
      %s59 = ssub.s32 %s25, %s32
      %s60 = sor.u32 %s58, %s59
      %p61 = scmp.eq.s32.totalorder %s60, 0
      %s63 = sadd.s32 %s62, 1
      %s64 = scalar_select %p61, %s62, %s63
      %p67 = pneg %p61
      %p68 = scmp.eq.s32.totalorder %s17, 1
      %p69 = por %p67, %p68
      %p70 = scmp.ne.s32.totalorder %s62, %s65
      %p71 = scmp.eq.s32.totalorder %s17, 0
      %p72 = por %p70, %p71
      %p73 = scmp.ne.s32.totalorder %s62, %s65
      %p74 = scmp.eq.s32.totalorder %s22, 1
      %p75 = por %p73, %p74
      %p76 = scmp.ne.s32.totalorder %s65, %s66
      %p77 = scmp.eq.s32.totalorder %s22, 0
      %p78 = por %p76, %p77
      %p79 = scmp.ne.s32.totalorder %s65, %s66
      %p80 = scmp.eq.s32.totalorder %s23, 1
      %p81 = por %p79, %p80
      %p83 = scmp.ne.s32.totalorder %s66, %s82
      %p84 = scmp.eq.s32.totalorder %s23, 0
      %p85 = por %p83, %p84
      %s87 = sadd.s32 %s86, 1
      %p90 = scmp.eq.s32.totalorder %s17, 1
      %p91 = scmp.ne.s32.totalorder %s86, %s88
      %p92 = scmp.eq.s32.totalorder %s17, 0
      %p93 = por %p91, %p92
      %p94 = scmp.ne.s32.totalorder %s86, %s88
      %p95 = scmp.eq.s32.totalorder %s22, 1
      %p96 = por %p94, %p95
      %p97 = scmp.ne.s32.totalorder %s88, %s89
      %p98 = scmp.eq.s32.totalorder %s22, 0
      %p99 = por %p97, %p98
      %p100 = scmp.ne.s32.totalorder %s88, %s89
      %p101 = scmp.eq.s32.totalorder %s23, 1
      %p102 = por %p100, %p101
      %p104 = scmp.ne.s32.totalorder %s89, %s103
      %p105 = scmp.eq.s32.totalorder %s23, 0
      %p106 = por %p104, %p105
      %s107 = ssub.s32 %s24, %s36
      %s108 = ssub.s32 %s25, %s32
      %s109 = sor.u32 %s107, %s108
      %p110 = scmp.eq.s32.totalorder %s109, 0
      %s112 = sadd.s32 %s111, 1
      %s113 = scalar_select %p110, %s111, %s112
      %p116 = pneg %p110
      %p117 = scmp.eq.s32.totalorder %s17, 1
      %p118 = por %p116, %p117
      %p119 = scmp.ne.s32.totalorder %s111, %s114
      %p120 = scmp.eq.s32.totalorder %s17, 0
      %p121 = por %p119, %p120
      %p122 = scmp.ne.s32.totalorder %s111, %s114
      %p123 = scmp.eq.s32.totalorder %s22, 1
      %p124 = por %p122, %p123
      %p125 = scmp.ne.s32.totalorder %s114, %s115
      %p126 = scmp.eq.s32.totalorder %s22, 0
      %p127 = por %p125, %p126
      %p128 = scmp.ne.s32.totalorder %s114, %s115
      %p129 = scmp.eq.s32.totalorder %s23, 1
      %p130 = por %p128, %p129
      %p132 = scmp.ne.s32.totalorder %s115, %s131
      %p133 = scmp.eq.s32.totalorder %s23, 0
      %p134 = por %p132, %p133
      %p135 = scmp.le.s32.totalorder 1, %s17
      %p136 = scmp.lt.s32.totalorder %s17, 3
      %p137 = pnand %p135, %p136
      %p138 = pneg %p137
      // Predicated region
      $region9: #{tpu_custom_call.1} parent=5 // pred_check
        _
      $region10: #{tpu_custom_call.1} parent=5 // pred_check_branch
        %140 = sbr.rel (%p137) target = $region12
      $region11: #{tpu_custom_call.1} parent=5 // pred_region
        %s141 = ssub.s32 %s17, 1
        // Predicated region
        $region13: #{tpu_custom_call.1} parent=11 // pred_check
          %p142 = pneg %p50
        $region14: #{tpu_custom_call.1} parent=11 // pred_check_branch
          %144 = sbr.rel (%p142) target = $region16
        $region15: #{tpu_custom_call.1} parent=11 // pred_region
          _
        $region16: #{tpu_custom_call.1} parent=11 // pred_fallthru
          _
        // Predicated region
        $region17: #{tpu_custom_call.1} parent=11 // pred_check
          %p145 = pneg %p99
        $region18: #{tpu_custom_call.1} parent=11 // pred_check_branch
          %147 = sbr.rel (%p145) target = $region20
        $region19: #{tpu_custom_call.1} parent=11 // pred_region
          %s149 = ssub.s32 3072, 3072
          %150 = vsyncadd [#allocation7], %s149
          %s151 = sshll.u32 [#allocation6], 4
          %s152 = int_to_ptr.vmem [resolvable:$true] %s151
          %157 = dma.hbm_to_vmem [thread:$0]  %s2, 3072, %s152, [#allocation7], 128, 128, 8
        $region20: #{tpu_custom_call.1} parent=11 // pred_fallthru
          _
      $region12: #{tpu_custom_call.1} parent=5 // pred_fallthru
        _
      %p158 = scmp.lt.s32.totalorder %s17, 2
      // Predicated region
      $region21: #{tpu_custom_call.1} parent=5 // pred_check
        %p159 = pneg %p158
      $region22: #{tpu_custom_call.1} parent=5 // pred_check_branch
        %161 = sbr.rel (%p159) target = $region24
      $region23: #{tpu_custom_call.1} parent=5 // pred_region
        // Predicated region
        $region25: #{tpu_custom_call.1} parent=23 // pred_check
          %p162 = pneg %p72
        $region26: #{tpu_custom_call.1} parent=23 // pred_check_branch
          %164 = sbr.rel (%p162) target = $region28
        $region27: #{tpu_custom_call.1} parent=23 // pred_region
          %s165 = sand.u32 %s62, 1
          %s166 = scalar_lea.sflag [#allocation4], %s165
          %s167 = sand.u32 %s62, 1
          %s168 = smul.addr %s167, 16
          %s169 = scalar_lea.vmem [#allocation3], %s168
          %s171 = ssub.s32 256, 256
          %172 = vsyncadd %s166, %s171
          %s173 = smul.addr %s24, 2
          %s174 = sadd.s32 %s25, %s173
          %s175 = smul.addr %s174, 128
          %s176 = scalar_lea.hbm %s1, %s175
          %s177 = sshll.u32 %s169, 4
          %s178 = int_to_ptr.vmem [resolvable:$true] %s177
          %183 = dma.hbm_to_vmem [thread:$0]  %s176, 256, %s178, %s166, 128, 128, 8
        $region28: #{tpu_custom_call.1} parent=23 // pred_fallthru
          _
      $region24: #{tpu_custom_call.1} parent=5 // pred_fallthru
        _
      %p184 = scmp.le.s32.totalorder 1, %s17
      %p185 = scmp.lt.s32.totalorder %s17, 3
      %p186 = pnand %p184, %p185
      %p187 = pneg %p186
      // Predicated region
      $region29: #{tpu_custom_call.1} parent=5 // pred_check
        _
      $region30: #{tpu_custom_call.1} parent=5 // pred_check_branch
        %189 = sbr.rel (%p186) target = $region32
      $region31: #{tpu_custom_call.1} parent=5 // pred_region
        %s190 = ssub.s32 %s17, 1
        %s191 = sand.u32 %s65, 1
        %s192 = scalar_lea.sflag [#allocation4], %s191
        %s193 = sand.u32 %s65, 1
        %s194 = smul.addr %s193, 16
        %s195 = scalar_lea.vmem [#allocation3], %s194
        // Predicated region
        $region33: #{tpu_custom_call.1} parent=31 // pred_check
          %p196 = pneg %p78
        $region34: #{tpu_custom_call.1} parent=31 // pred_check_branch
          %198 = sbr.rel (%p196) target = $region36
        $region35: #{tpu_custom_call.1} parent=31 // pred_region
          %199 = dma.done %s192, 256
        $region36: #{tpu_custom_call.1} parent=31 // pred_fallthru
          _
        // Predicated region
        $region37: #{tpu_custom_call.1} parent=31 // pred_check
          %p200 = pneg %p99
        $region38: #{tpu_custom_call.1} parent=31 // pred_check_branch
          %202 = sbr.rel (%p200) target = $region40
        $region39: #{tpu_custom_call.1} parent=31 // pred_region
          %203 = dma.done [#allocation7], 3072
        $region40: #{tpu_custom_call.1} parent=31 // pred_fallthru
          _
        %p204 = pneg %p50
        %p205 = pneg %p47
        %s206 = sand.u32 %s65, 1
        %s207 = scalar_lea.sflag [#allocation4], %s206
        %s208 = sand.u32 %s65, 1
        %s209 = smul.addr %s208, 16
        %s210 = scalar_lea.vmem [#allocation3], %s209
        %p211 = pneg %p78
        %p212 = pneg %p75
        %p213 = pneg %p99
        %p214 = pneg %p96
        %p215 = pneg %p127
        %p216 = pneg %p124
        %s217 = sand.u32 %s114, 1
        %s218 = scalar_lea.sflag [#allocation5], %s217
        %s219 = sand.u32 %s114, 1
        %s220 = smul.addr %s219, 8
        %s221 = scalar_lea.vmem [#allocation8], %s220
        %s223 = sld [smem:[#allocation2]]
        %v224 = vld [vmem:[%s195] sm:$0xff]
        %v225 = vmax.f32 %v224, 1e-10
        %v226 = vlog2.pop %v225
        %v227 = vmul.f32 %v226, 0.6931472
        %v228 = vmul.f32 %v227, 4.3429446
        %v229 = vstv %s223
        %v230 = vmax.f32 %v228, %v229
        %v231 = vpack.c.bf16 %v230, %v230
        %v232 = vld [vmem:[#allocation6] sm:$0xff]
        %v233 = vld [vmem:[#allocation6 + $0x8] sm:$0xff]
        %v234 = vld [vmem:[#allocation6 + $0x10] sm:$0xff]
        %v235 = vld [vmem:[#allocation6 + $0x18] sm:$0xff]
        %v236 = vld [vmem:[#allocation6 + $0x20] sm:$0xff]
        %v237 = vld [vmem:[#allocation6 + $0x28] sm:$0xff]
        %v238 = vld [vmem:[#allocation6 + $0x30] sm:$0xff]
        %v239 = vld [vmem:[#allocation6 + $0x38] sm:$0xff]
        %s240 = scalar_lea.vmem %s195, 8 [#allocation3]
        %v241 = vld [vmem:[%s240] sm:$0xff]
        %v242 = vmax.f32 %v241, 1e-10
        %v243 = vlog2.pop %v242
        %v244 = vmul.f32 %v243, 0.6931472
        %v245 = vmul.f32 %v244, 4.3429446
        %v246 = vmax.f32 %v245, %v229
        %v247 = vpack.c.bf16 %v246, %v246
        %v248 = vld [vmem:[#allocation6 + $0x40] sm:$0xff]
        %v249 = vld [vmem:[#allocation6 + $0x48] sm:$0xff]
        %v250 = vld [vmem:[#allocation6 + $0x50] sm:$0xff]
        %v251 = vld [vmem:[#allocation6 + $0x58] sm:$0xff]
        %v252 = vld [vmem:[#allocation6 + $0x60] sm:$0xff]
        %v253 = vld [vmem:[#allocation6 + $0x68] sm:$0xff]
        %v254 = vld [vmem:[#allocation6 + $0x70] sm:$0xff]
        %v255 = vld [vmem:[#allocation6 + $0x78] sm:$0xff]
        %v264 = vunpack.c.l.b16 %v248
        %v265 = vunpack.c.h.b16 %v248
        %v266 = vunpack.c.l.b16 %v249
        %v267 = vunpack.c.h.b16 %v249
        %v268 = vunpack.c.l.b16 %v250
        %v269 = vunpack.c.h.b16 %v250
        %v270 = vunpack.c.l.b16 %v251
        %v271 = vunpack.c.h.b16 %v251
        %v272 = vunpack.c.l.b16 %v252
        %v273 = vunpack.c.h.b16 %v252
        %v274 = vunpack.c.l.b16 %v253
        %v275 = vunpack.c.h.b16 %v253
        %v276 = vunpack.c.l.b16 %v254
        %v277 = vunpack.c.h.b16 %v254
        %v278 = vunpack.c.l.b16 %v255
        %v279 = vunpack.c.h.b16 %v255
        %v280 = vpack.c.b16 %v266, %v264
        %v281 = vpack.c.b16 %v267, %v265
        %v282 = vpack.c.b16 %v270, %v268
        %v283 = vpack.c.b16 %v271, %v269
        %v284 = vpack.c.b16 %v274, %v272
        %v285 = vpack.c.b16 %v275, %v273
        %v286 = vpack.c.b16 %v278, %v276
        %v287 = vpack.c.b16 %v279, %v277
        %vm296 = vcmask 523264
        %v298 = vsel %vm296, %v247, 0
        %300 = vmatprep.subr.bf16.mxu0 0
        %301 = vmatpush1.bf16.msra.mxu0 0
        %302 = vmatprep.subr.bf16.mxu0 0
        %303 = vmatpush1.bf16.msra.mxu0 0
        %304 = vmatprep.subr.bf16.mxu0 0
        %305 = vmatpush1.bf16.msra.mxu0 0
        %306 = vmatprep.subr.bf16.mxu0 0
        %307 = vmatpush1.bf16.msra.mxu0 0
        %308 = vmatprep.subr.bf16.mxu0 %v287
        %309 = vmatpush1.bf16.msra.mxu0 %v286
        %310 = vmatprep.subr.bf16.mxu0 %v285
        %311 = vmatpush1.bf16.msra.mxu0 %v284
        %312 = vmatprep.subr.bf16.mxu0 %v283
        %313 = vmatpush1.bf16.msra.mxu0 %v282
        %314 = vmatprep.subr.bf16.mxu0 %v281
        %315 = vmatpush1.bf16.msra.mxu0 %v280
        %316 = vmatprep.subr.bf16.mxu0 0
        %317 = vmatpush2.bf16.msra.mxu0 0
        %318 = vmatprep.subr.bf16.mxu0 0
        %319 = vmatpush2.bf16.msra.mxu0 0
        %320 = vmatprep.subr.bf16.mxu0 0
        %321 = vmatpush2.bf16.msra.mxu0 0
        %322 = vmatprep.subr.bf16.mxu0 0
        %323 = vmatpush2.bf16.msra.mxu0 0
        %324 = vmatprep.subr.bf16.mxu0 0
        %325 = vmatpush2.bf16.msra.mxu0 0
        %326 = vmatprep.subr.bf16.mxu0 0
        %327 = vmatpush2.bf16.msra.mxu0 0
        %328 = vmatprep.subr.bf16.mxu0 0
        %329 = vmatpush2.bf16.msra.mxu0 0
        %330 = vmatprep.subr.bf16.mxu0 0
        %331 = vmatpush2.bf16.msra.mxu0 0
        %332 = vmatprep.mubr.bf16.mxu0 0
        %333 = vmatmul.mubr.bf16.gmra.mxu0 %v298
        %v334 = vpop.f32.mrf.mxu0
        %v335 = vadd.f32 0.0, %v334
        %v336 = vpop.f32.mrf.mxu0
        %v337 = vadd.f32 0.0, %v336
        %v338 = vpop.f32.mrf.mxu0
        %v339 = vpop.f32.mrf.mxu0
        %340 = vdwg.mxu0
        %v349 = vunpack.c.l.b16 %v232
        %v350 = vunpack.c.h.b16 %v232
        %v351 = vunpack.c.l.b16 %v233
        %v352 = vunpack.c.h.b16 %v233
        %v353 = vunpack.c.l.b16 %v234
        %v354 = vunpack.c.h.b16 %v234
        %v355 = vunpack.c.l.b16 %v235
        %v356 = vunpack.c.h.b16 %v235
        %v357 = vunpack.c.l.b16 %v236
        %v358 = vunpack.c.h.b16 %v236
        %v359 = vunpack.c.l.b16 %v237
        %v360 = vunpack.c.h.b16 %v237
        %v361 = vunpack.c.l.b16 %v238
        %v362 = vunpack.c.h.b16 %v238
        %v363 = vunpack.c.l.b16 %v239
        %v364 = vunpack.c.h.b16 %v239
        %v365 = vpack.c.b16 %v351, %v349
        %v366 = vpack.c.b16 %v352, %v350
        %v367 = vpack.c.b16 %v355, %v353
        %v368 = vpack.c.b16 %v356, %v354
        %v369 = vpack.c.b16 %v359, %v357
        %v370 = vpack.c.b16 %v360, %v358
        %v371 = vpack.c.b16 %v363, %v361
        %v372 = vpack.c.b16 %v364, %v362
        %v382 = vsel %vm296, %v231, 0
        %384 = vmatprep.subr.bf16.mxu0 0
        %385 = vmatpush1.bf16.msra.mxu0 0
        %386 = vmatprep.subr.bf16.mxu0 0
        %387 = vmatpush1.bf16.msra.mxu0 0
        %388 = vmatprep.subr.bf16.mxu0 0
        %389 = vmatpush1.bf16.msra.mxu0 0
        %390 = vmatprep.subr.bf16.mxu0 0
        %391 = vmatpush1.bf16.msra.mxu0 0
        %392 = vmatprep.subr.bf16.mxu0 %v372
        %393 = vmatpush1.bf16.msra.mxu0 %v371
        %394 = vmatprep.subr.bf16.mxu0 %v370
        %395 = vmatpush1.bf16.msra.mxu0 %v369
        %396 = vmatprep.subr.bf16.mxu0 %v368
        %397 = vmatpush1.bf16.msra.mxu0 %v367
        %398 = vmatprep.subr.bf16.mxu0 %v366
        %399 = vmatpush1.bf16.msra.mxu0 %v365
        %400 = vmatprep.subr.bf16.mxu0 0
        %401 = vmatpush2.bf16.msra.mxu0 0
        %402 = vmatprep.subr.bf16.mxu0 0
        %403 = vmatpush2.bf16.msra.mxu0 0
        %404 = vmatprep.subr.bf16.mxu0 0
        %405 = vmatpush2.bf16.msra.mxu0 0
        %406 = vmatprep.subr.bf16.mxu0 0
        %407 = vmatpush2.bf16.msra.mxu0 0
        %408 = vmatprep.subr.bf16.mxu0 0
        %409 = vmatpush2.bf16.msra.mxu0 0
        %410 = vmatprep.subr.bf16.mxu0 0
        %411 = vmatpush2.bf16.msra.mxu0 0
        %412 = vmatprep.subr.bf16.mxu0 0
        %413 = vmatpush2.bf16.msra.mxu0 0
        %414 = vmatprep.subr.bf16.mxu0 0
        %415 = vmatpush2.bf16.msra.mxu0 0
        %416 = vmatprep.mubr.bf16.mxu0 0
        %417 = vmatmul.mubr.bf16.gmra.mxu0 %v382
        %v418 = vpop.f32.mrf.mxu0
        %v419 = vadd.f32 %v335, %v418
        %v420 = vpop.f32.mrf.mxu0
        %v421 = vadd.f32 %v337, %v420
        %v422 = vpop.f32.mrf.mxu0
        %v423 = vpop.f32.mrf.mxu0
        %424 = vdwg.mxu0
        %v425 = vmul.f32 %v230, %v230
        %v426 = vadd.f32 %v425, 1e-08
        %v427 = vlog2.pop %v426
        %v428 = vmul.f32 %v427, 0.6931472
        %v429 = vpack.c.bf16 %v428, %v428
        %v430 = vld [vmem:[#allocation6 + $0x80] sm:$0xff]
        %v431 = vld [vmem:[#allocation6 + $0x88] sm:$0xff]
        %v432 = vld [vmem:[#allocation6 + $0x90] sm:$0xff]
        %v433 = vld [vmem:[#allocation6 + $0x98] sm:$0xff]
        %v434 = vld [vmem:[#allocation6 + $0xa0] sm:$0xff]
        %v435 = vld [vmem:[#allocation6 + $0xa8] sm:$0xff]
        %v436 = vld [vmem:[#allocation6 + $0xb0] sm:$0xff]
        %v437 = vld [vmem:[#allocation6 + $0xb8] sm:$0xff]
        %v446 = vunpack.c.l.b16 %v430
        %v447 = vunpack.c.h.b16 %v430
        %v448 = vunpack.c.l.b16 %v431
        %v449 = vunpack.c.h.b16 %v431
        %v450 = vunpack.c.l.b16 %v432
        %v451 = vunpack.c.h.b16 %v432
        %v452 = vunpack.c.l.b16 %v433
        %v453 = vunpack.c.h.b16 %v433
        %v454 = vunpack.c.l.b16 %v434
        %v455 = vunpack.c.h.b16 %v434
        %v456 = vunpack.c.l.b16 %v435
        %v457 = vunpack.c.h.b16 %v435
        %v458 = vunpack.c.l.b16 %v436
        %v459 = vunpack.c.h.b16 %v436
        %v460 = vunpack.c.l.b16 %v437
        %v461 = vunpack.c.h.b16 %v437
        %v462 = vpack.c.b16 %v448, %v446
        %v463 = vpack.c.b16 %v449, %v447
        %v464 = vpack.c.b16 %v452, %v450
        %v465 = vpack.c.b16 %v453, %v451
        %v466 = vpack.c.b16 %v456, %v454
        %v467 = vpack.c.b16 %v457, %v455
        %v468 = vpack.c.b16 %v460, %v458
        %v469 = vpack.c.b16 %v461, %v459
        %v479 = vsel %vm296, %v429, 0
        %481 = vmatprep.subr.bf16.mxu0 0
        %482 = vmatpush1.bf16.msra.mxu0 0
        %483 = vmatprep.subr.bf16.mxu0 0
        %484 = vmatpush1.bf16.msra.mxu0 0
        %485 = vmatprep.subr.bf16.mxu0 0
        %486 = vmatpush1.bf16.msra.mxu0 0
        %487 = vmatprep.subr.bf16.mxu0 0
        %488 = vmatpush1.bf16.msra.mxu0 0
        %489 = vmatprep.subr.bf16.mxu0 %v469
        %490 = vmatpush1.bf16.msra.mxu0 %v468
        %491 = vmatprep.subr.bf16.mxu0 %v467
        %492 = vmatpush1.bf16.msra.mxu0 %v466
        %493 = vmatprep.subr.bf16.mxu0 %v465
        %494 = vmatpush1.bf16.msra.mxu0 %v464
        %495 = vmatprep.subr.bf16.mxu0 %v463
        %496 = vmatpush1.bf16.msra.mxu0 %v462
        %497 = vmatprep.subr.bf16.mxu0 0
        %498 = vmatpush2.bf16.msra.mxu0 0
        %499 = vmatprep.subr.bf16.mxu0 0
        %500 = vmatpush2.bf16.msra.mxu0 0
        %501 = vmatprep.subr.bf16.mxu0 0
        %502 = vmatpush2.bf16.msra.mxu0 0
        %503 = vmatprep.subr.bf16.mxu0 0
        %504 = vmatpush2.bf16.msra.mxu0 0
        %505 = vmatprep.subr.bf16.mxu0 0
        %506 = vmatpush2.bf16.msra.mxu0 0
        %507 = vmatprep.subr.bf16.mxu0 0
        %508 = vmatpush2.bf16.msra.mxu0 0
        %509 = vmatprep.subr.bf16.mxu0 0
        %510 = vmatpush2.bf16.msra.mxu0 0
        %511 = vmatprep.subr.bf16.mxu0 0
        %512 = vmatpush2.bf16.msra.mxu0 0
        %513 = vmatprep.mubr.bf16.mxu0 0
        %514 = vmatmul.mubr.bf16.gmra.mxu0 %v479
        %v515 = vpop.f32.mrf.mxu0
        %v516 = vadd.f32 0.0, %v515
        %v517 = vpop.f32.mrf.mxu0
        %v518 = vadd.f32 0.0, %v517
        %v519 = vpop.f32.mrf.mxu0
        %v520 = vpop.f32.mrf.mxu0
        %521 = vdwg.mxu0
        %v522 = vadd.f32 %v419, %v516
        %v523 = vadd.f32 %v421, %v518
        %v524 = vpack.c.bf16 %v522, %v522
        %v525 = vpack.c.bf16 %v523, %v523
        %v528 = vunpack.c.l.b16 %v524
        %v529 = vunpack.c.l.b16 %v525
        %v530 = vpack.c.b16 %v529, %v528
        %532 = vst [vmem:[%s221] sm:$0xff] %v530
        %s533 = sand.u32 %s114, 1
        %s534 = scalar_lea.sflag [#allocation5], %s533
        %s535 = sand.u32 %s114, 1
        %s536 = smul.addr %s535, 8
        %s537 = scalar_lea.vmem [#allocation8], %s536
        // Predicated region
        $region41: #{tpu_custom_call.1} parent=31 // pred_check
          %p538 = pneg %p124
        $region42: #{tpu_custom_call.1} parent=31 // pred_check_branch
          %540 = sbr.rel (%p538) target = $region44
        $region43: #{tpu_custom_call.1} parent=31 // pred_region
          %s542 = ssub.s32 128, 128
          %543 = vsyncadd %s534, %s542
          %s544 = smul.addr %s27, 2
          %s545 = smul.addr %s26, 2
          %s546 = sadd.s32 %s544, %s545
          %s547 = smul.addr %s546, 64
          %s548 = scalar_lea.hbm %s3, %s547
          %s550 = sshll.u32 %s537, 4
          %s551 = int_to_ptr.vmem [resolvable:$true] %s550
          %553 = dma.vmem_to_hbm [thread:$0]  %s551, 128, %s548, %s534
        $region44: #{tpu_custom_call.1} parent=31 // pred_fallthru
          _
      $region32: #{tpu_custom_call.1} parent=5 // pred_fallthru
        _
      %p554 = scmp.le.s32.totalorder 2, %s17
      // Predicated region
      $region45: #{tpu_custom_call.1} parent=5 // pred_check
        %p555 = pneg %p554
      $region46: #{tpu_custom_call.1} parent=5 // pred_check_branch
        %557 = sbr.rel (%p555) target = $region48
      $region47: #{tpu_custom_call.1} parent=5 // pred_region
        %s558 = ssub.s32 %s17, 2
        // Predicated region
        $region49: #{tpu_custom_call.1} parent=47 // pred_check
          %p559 = pneg %p130
        $region50: #{tpu_custom_call.1} parent=47 // pred_check_branch
          %561 = sbr.rel (%p559) target = $region52
        $region51: #{tpu_custom_call.1} parent=47 // pred_region
          %s562 = sand.u32 %s115, 1
          %s563 = scalar_lea.sflag [#allocation5], %s562
          %s564 = sand.u32 %s115, 1
          %s565 = smul.addr %s564, 8
          %s566 = scalar_lea.vmem [#allocation8], %s565
          %567 = dma.done %s563, 128
        $region52: #{tpu_custom_call.1} parent=47 // pred_fallthru
          _
      $region48: #{tpu_custom_call.1} parent=5 // pred_fallthru
        _
    $region6: #{tpu_custom_call.1} parent=1 // loop_footer
      %s21 = sadd.s32 1, %s17
    $region7: #{tpu_custom_call.1} parent=1 // loop_footer_branch
      %16 = sbr.rel target = $region3
    $region8: #{tpu_custom_call.1} parent=1 // loop_exit
      _
    %568 = vsyncpa [#allocation4], 1
    %s569 = scalar_lea.sflag [#allocation4], 1
    %570 = vsyncpa %s569, 1
    %571 = vsyncpa [#allocation7], 1
    %572 = vsyncpa [#allocation5], 1
    %s573 = scalar_lea.sflag [#allocation5], 1
    %574 = vsyncpa %s573, 1

</llo_original>
